<compile_context>
chip_gen: v7x
topology: tpu7x:2x2x1
jax: 0.10.0
libtpu: 0.0.40
codegen_flags: <defaults>
</compile_context>

<pallas_src>
import functools
import math

import jax
import jax.numpy as jnp
from jax import lax
from jax.experimental import pallas as pl
from jax.experimental.pallas import tpu as pltpu


_NEG_INF = jnp.float32(-1e30)


def _round_up(a, b):
    return (a + b - 1) // b * b


def _flash_self_attn_kernel(xq_ref, xkv_ref, wq_ref, wkv_ref, o_ref,
                            q_s, m_s, l_s, acc_s,
                            *, dkq_p, scale, seq_len, kv_tile, need_mask):
    j = pl.program_id(1)

    @pl.when(j == 0)
    def _init():
        # Q projection for this query tile, pre-scaled by 1/sqrt(d_kq).
        # Hoisted out of the KV loop (runs once per query tile).
        q = jnp.dot(xq_ref[...], wq_ref[...],
                    preferred_element_type=jnp.float32)
        q_s[...] = q * jnp.float32(scale)
        m_s[...] = jnp.full_like(m_s, -jnp.inf)
        l_s[...] = jnp.zeros_like(l_s)
        acc_s[...] = jnp.zeros_like(acc_s)

    # Fused K/V projection for this KV tile: one lane-dense MXU matmul.
    kv = jnp.dot(xkv_ref[...], wkv_ref[...],
                 preferred_element_type=jnp.float32)      # [tk, dkq_p + dv_p]
    k = kv[:, :dkq_p]                                     # [tk, dkq_p]
    v = kv[:, dkq_p:]                                     # [tk, dv_p]

    # scores = (Q * scale) @ K^T — contract the last dims directly (no .T).
    s = lax.dot_general(q_s[...], k,
                        dimension_numbers=(((1,), (1,)), ((), ())),
                        preferred_element_type=jnp.float32)   # [tq, tk]

    if need_mask:
        # Mask padded key rows (sequence padded up to a tile multiple).
        kv_idx = j * kv_tile + lax.broadcasted_iota(jnp.int32, s.shape, 1)
        s = jnp.where(kv_idx < seq_len, s, _NEG_INF)

    # Online (flash) softmax update.
    m_new = jnp.maximum(m_s[...], jnp.max(s, axis=-1, keepdims=True))
    alpha = jnp.exp(m_s[...] - m_new)
    p = jnp.exp(s - m_new)
    l_s[...] = alpha * l_s[...] + jnp.sum(p, axis=-1, keepdims=True)
    acc_s[...] = alpha * acc_s[...] + jnp.dot(
        p, v, preferred_element_type=jnp.float32)
    m_s[...] = m_new

    @pl.when(j == pl.num_programs(1) - 1)
    def _finalize():
        inv_l = pl.reciprocal(l_s[...])   # one reciprocal per row, then multiply
        o_ref[...] = (acc_s[...] * inv_l).astype(o_ref.dtype)


def self_attention(x, w_query, w_key, w_value, *, tile=256, matmul_dtype=None):
    """x: [seq, d_in]; w_query/w_key: [d_in, d_kq]; w_value: [d_in, d_v].

    matmul_dtype: optionally cast x / weights (e.g. jnp.bfloat16 on v6e/v7x)
    before the MXU matmuls; softmax + accumulation stay in f32.
    """
    seq, d_in = x.shape
    d_kq = w_query.shape[-1]
    d_v = w_value.shape[-1]
    out_dtype = x.dtype

    # Lane-dense feature padding (multiples of 128); zeros don't change results.
    dkq_p = _round_up(d_kq, 128)
    dv_p = _round_up(d_v, 128)

    # Tile size over the sequence (both query and KV axes use the same tile so
    # one padded x serves both). Padding < tile, so every KV tile has at least
    # one valid key.
    t = _round_up(min(int(tile), _round_up(seq, 8)), 8)
    seq_p = _round_up(seq, t)
    need_mask = seq_p != seq

    x_p = jnp.pad(x, ((0, seq_p - seq), (0, 0))) if need_mask else x
    w_q_p = jnp.pad(w_query, ((0, 0), (0, dkq_p - d_kq)))
    w_k_p = jnp.pad(w_key, ((0, 0), (0, dkq_p - d_kq)))
    w_v_p = jnp.pad(w_value, ((0, 0), (0, dv_p - d_v)))
    w_kv_p = jnp.concatenate([w_k_p, w_v_p], axis=1)       # [d_in, dkq_p+dv_p]

    if matmul_dtype is not None:
        x_p = x_p.astype(matmul_dtype)
        w_q_p = w_q_p.astype(matmul_dtype)
        w_kv_p = w_kv_p.astype(matmul_dtype)

    scale = 1.0 / math.sqrt(d_kq)
    n_t = seq_p // t

    kernel = functools.partial(
        _flash_self_attn_kernel,
        dkq_p=dkq_p, scale=scale, seq_len=seq, kv_tile=t, need_mask=need_mask)

    out = pl.pallas_call(
        kernel,
        out_shape=jax.ShapeDtypeStruct((seq_p, dv_p), out_dtype),
        grid_spec=pltpu.PrefetchScalarGridSpec(
            num_scalar_prefetch=0,
            grid=(n_t, n_t),                                 # (q tiles, kv tiles)
            in_specs=[
                pl.BlockSpec((t, d_in), lambda i, j: (i, 0)),          # x rows for Q
                pl.BlockSpec((t, d_in), lambda i, j: (j, 0)),          # x rows for K/V
                pl.BlockSpec((d_in, dkq_p), lambda i, j: (0, 0)),      # W_q (padded)
                pl.BlockSpec((d_in, dkq_p + dv_p), lambda i, j: (0, 0)),  # [W_k|W_v]
            ],
            out_specs=pl.BlockSpec((t, dv_p), lambda i, j: (i, 0)),
            scratch_shapes=[
                pltpu.VMEM((t, dkq_p), jnp.float32),   # scaled Q tile
                pltpu.VMEM((t, 1), jnp.float32),       # running max
                pltpu.VMEM((t, 1), jnp.float32),       # running denom
                pltpu.VMEM((t, dv_p), jnp.float32),    # output accumulator
            ]),
        compiler_params=pltpu.CompilerParams(
            dimension_semantics=("parallel", "arbitrary")),
    )(x_p, x_p, w_q_p, w_kv_p)

    return out[:seq, :d_v]


def _reference(x, w_query, w_key, w_value):
    keys = x @ w_key
    queries = x @ w_query
    values = x @ w_value
    scores = queries @ keys.T
    weights = jax.nn.softmax(scores / jnp.sqrt(jnp.float32(w_query.shape[-1])),
                             axis=-1)
    return weights @ values


if __name__ == "__main__":
    # Small shapes consistent with the module's forward: x is [seq, d_in].
    seq, d_in, d_out_kq, d_out_v = 8, 32, 16, 16

    key = jax.random.PRNGKey(0)
    k_x, k_q, k_k, k_v = jax.random.split(key, 4)

    x = jax.random.normal(k_x, (seq, d_in), dtype=jnp.float32)
    # torch.rand -> uniform [0, 1); mimic deterministically with jax.random.uniform
    w_query = jax.random.uniform(k_q, (d_in, d_out_kq), dtype=jnp.float32)
    w_key = jax.random.uniform(k_k, (d_in, d_out_kq), dtype=jnp.float32)
    w_value = jax.random.uniform(k_v, (d_in, d_out_v), dtype=jnp.float32)

    out = self_attention(x, w_query, w_key, w_value)
    out = jax.block_until_ready(out)

    ref = _reference(x, w_query, w_key, w_value)
    assert out.shape == (seq, d_out_v)
    assert jnp.allclose(out, ref, atol=1e-4, rtol=1e-4), "mismatch vs reference"

    print("KERNEL_OK")
</pallas_src>

<mosaic_0001>
module attributes {stable_mosaic.version = 11 : i64} {
  func.func @_flash_self_attn_kernel(%arg0: i32, %arg1: i32, %arg2: memref<8x32xf32, #tpu.memory_space<vmem>>, %arg3: memref<8x32xf32, #tpu.memory_space<vmem>>, %arg4: memref<32x128xf32, #tpu.memory_space<vmem>>, %arg5: memref<32x256xf32, #tpu.memory_space<vmem>>, %arg6: memref<8x128xf32, #tpu.memory_space<vmem>>, %arg7: memref<8x128xf32, #tpu.memory_space<vmem>>, %arg8: memref<8x1xf32, #tpu.memory_space<vmem>>, %arg9: memref<8x1xf32, #tpu.memory_space<vmem>>, %arg10: memref<8x128xf32, #tpu.memory_space<vmem>>) attributes {dimension_semantics = [#tpu.dimension_semantics<parallel>, #tpu.dimension_semantics<arbitrary>], iteration_bounds = array<i64: 1, 1>, scalar_prefetch = 0 : i64, scratch_operands = 4 : i64, tpu.core_type = #tpu.core_type<tc>, window_params = [{transform_indices = @transform_0, window_bounds = array<i64: 8, 32>}, {transform_indices = @transform_1, window_bounds = array<i64: 8, 32>}, {pipeline_mode = #tpu.pipeline_mode<synchronous>, transform_indices = @transform_2, window_bounds = array<i64: 32, 128>}, {pipeline_mode = #tpu.pipeline_mode<synchronous>, transform_indices = @transform_3, window_bounds = array<i64: 32, 256>}, {transform_indices = @transform_4, window_bounds = array<i64: 8, 128>}]} {
    %c0_i32 = arith.constant 0 : i32
    %0 = arith.cmpi eq, %arg1, %c0_i32 : i32
    %1 = arith.extui %0 : i1 to i32
    %c0_i32_0 = arith.constant 0 : i32
    %2 = arith.cmpi ne, %1, %c0_i32_0 : i32
    scf.if %2 {
      %c0_26 = arith.constant 0 : index
      %c0_27 = arith.constant 0 : index
      %36 = vector.load %arg2[%c0_26, %c0_27] : memref<8x32xf32, #tpu.memory_space<vmem>>, vector<8x32xf32>
      %c0_28 = arith.constant 0 : index
      %c0_29 = arith.constant 0 : index
      %37 = vector.load %arg4[%c0_28, %c0_29] : memref<32x128xf32, #tpu.memory_space<vmem>>, vector<32x128xf32>
      %cst_30 = arith.constant dense<0.000000e+00> : vector<8x128xf32>
      %38 = tpu.matmul %36, %37, %cst_30 {dimension_numbers = #tpu.dot_dimension_numbers<[1], [0], [0], [1], [0, 0, 1, 1], [], []>} : vector<8x32xf32>, vector<32x128xf32>, vector<8x128xf32> -> vector<8x128xf32>
      %cst_31 = arith.constant 2.500000e-01 : f32
      %39 = vector.broadcast %cst_31 : f32 to vector<8x128xf32>
      %40 = arith.mulf %38, %39 : vector<8x128xf32>
      %c0_32 = arith.constant 0 : index
      %c0_33 = arith.constant 0 : index
      %41 = vector.load %arg7[%c0_32, %c0_33] : memref<8x128xf32, #tpu.memory_space<vmem>>, vector<8x128xf32>
      tpu.vector_store %arg7[%c0_32, %c0_33], %40 {strides = array<i32>} : memref<8x128xf32, #tpu.memory_space<vmem>>, vector<8x128xf32>,
      %cst_34 = arith.constant 0xFF800000 : f32
      %42 = vector.broadcast %cst_34 : f32 to vector<8x1xf32>
      %c0_35 = arith.constant 0 : index
      %c0_36 = arith.constant 0 : index
      %43 = vector.load %arg8[%c0_35, %c0_36] : memref<8x1xf32, #tpu.memory_space<vmem>>, vector<8x1xf32>
      tpu.vector_store %arg8[%c0_35, %c0_36], %42 {strides = array<i32>} : memref<8x1xf32, #tpu.memory_space<vmem>>, vector<8x1xf32>,
      %cst_37 = arith.constant 0.000000e+00 : f32
      %44 = vector.broadcast %cst_37 : f32 to vector<8x1xf32>
      %c0_38 = arith.constant 0 : index
      %c0_39 = arith.constant 0 : index
      %45 = vector.load %arg9[%c0_38, %c0_39] : memref<8x1xf32, #tpu.memory_space<vmem>>, vector<8x1xf32>
      tpu.vector_store %arg9[%c0_38, %c0_39], %44 {strides = array<i32>} : memref<8x1xf32, #tpu.memory_space<vmem>>, vector<8x1xf32>,
      %cst_40 = arith.constant 0.000000e+00 : f32
      %46 = vector.broadcast %cst_40 : f32 to vector<8x128xf32>
      %c0_41 = arith.constant 0 : index
      %c0_42 = arith.constant 0 : index
      %47 = vector.load %arg10[%c0_41, %c0_42] : memref<8x128xf32, #tpu.memory_space<vmem>>, vector<8x128xf32>
      tpu.vector_store %arg10[%c0_41, %c0_42], %46 {strides = array<i32>} : memref<8x128xf32, #tpu.memory_space<vmem>>, vector<8x128xf32>,
    } else {
    }
    %c0 = arith.constant 0 : index
    %c0_1 = arith.constant 0 : index
    %3 = vector.load %arg3[%c0, %c0_1] : memref<8x32xf32, #tpu.memory_space<vmem>>, vector<8x32xf32>
    %c0_2 = arith.constant 0 : index
    %c0_3 = arith.constant 0 : index
    %4 = vector.load %arg5[%c0_2, %c0_3] : memref<32x256xf32, #tpu.memory_space<vmem>>, vector<32x256xf32>
    %cst = arith.constant dense<0.000000e+00> : vector<8x256xf32>
    %5 = tpu.matmul %3, %4, %cst {dimension_numbers = #tpu.dot_dimension_numbers<[1], [0], [0], [1], [0, 0, 1, 1], [], []>} : vector<8x32xf32>, vector<32x256xf32>, vector<8x256xf32> -> vector<8x256xf32>
    %6 = vector.extract_strided_slice %5 {offsets = [0, 0], sizes = [8, 128], strides = [1, 1]} : vector<8x256xf32> to vector<8x128xf32>
    %7 = vector.extract_strided_slice %5 {offsets = [0, 128], sizes = [8, 128], strides = [1, 1]} : vector<8x256xf32> to vector<8x128xf32>
    %c0_4 = arith.constant 0 : index
    %c0_5 = arith.constant 0 : index
    %8 = vector.load %arg7[%c0_4, %c0_5] : memref<8x128xf32, #tpu.memory_space<vmem>>, vector<8x128xf32>
    %cst_6 = arith.constant dense<0.000000e+00> : vector<8x8xf32>
    %9 = tpu.matmul %8, %6, %cst_6 {dimension_numbers = #tpu.dot_dimension_numbers<[1], [1], [0], [0], [0, 0, 1, 0], [], []>} : vector<8x128xf32>, vector<8x128xf32>, vector<8x8xf32> -> vector<8x8xf32>
    %c0_7 = arith.constant 0 : index
    %c0_8 = arith.constant 0 : index
    %10 = vector.load %arg8[%c0_7, %c0_8] : memref<8x1xf32, #tpu.memory_space<vmem>>, vector<8x1xf32>
    %cst_9 = arith.constant dense<0xFF800000> : vector<8xf32>
    %11 = vector.multi_reduction <maximumf>, %9, %cst_9 [1] : vector<8x8xf32> to vector<8xf32>
    %12 = vector.shape_cast %11 : vector<8xf32> to vector<8x1xf32>
    %13 = arith.maximumf %10, %12 : vector<8x1xf32>
    %c0_10 = arith.constant 0 : index
    %c0_11 = arith.constant 0 : index
    %14 = vector.load %arg8[%c0_10, %c0_11] : memref<8x1xf32, #tpu.memory_space<vmem>>, vector<8x1xf32>
    %15 = arith.subf %14, %13 : vector<8x1xf32>
    %16 = math.exp %15 : vector<8x1xf32>
    %17 = vector.broadcast %13 : vector<8x1xf32> to vector<8x8xf32>
    %18 = arith.subf %9, %17 : vector<8x8xf32>
    %19 = math.exp %18 : vector<8x8xf32>
    %c0_12 = arith.constant 0 : index
    %c0_13 = arith.constant 0 : index
    %20 = vector.load %arg9[%c0_12, %c0_13] : memref<8x1xf32, #tpu.memory_space<vmem>>, vector<8x1xf32>
    %21 = arith.mulf %16, %20 : vector<8x1xf32>
    %cst_14 = arith.constant dense<0.000000e+00> : vector<8xf32>
    %22 = vector.multi_reduction <add>, %19, %cst_14 [1] : vector<8x8xf32> to vector<8xf32>
    %23 = vector.shape_cast %22 : vector<8xf32> to vector<8x1xf32>
    %24 = arith.addf %21, %23 : vector<8x1xf32>
    %c0_15 = arith.constant 0 : index
    %c0_16 = arith.constant 0 : index
    %25 = vector.load %arg9[%c0_15, %c0_16] : memref<8x1xf32, #tpu.memory_space<vmem>>, vector<8x1xf32>
    tpu.vector_store %arg9[%c0_15, %c0_16], %24 {strides = array<i32>} : memref<8x1xf32, #tpu.memory_space<vmem>>, vector<8x1xf32>,
    %c0_17 = arith.constant 0 : index
    %c0_18 = arith.constant 0 : index
    %26 = vector.load %arg10[%c0_17, %c0_18] : memref<8x128xf32, #tpu.memory_space<vmem>>, vector<8x128xf32>
    %27 = vector.broadcast %16 : vector<8x1xf32> to vector<8x128xf32>
    %28 = arith.mulf %27, %26 : vector<8x128xf32>
    %cst_19 = arith.constant dense<0.000000e+00> : vector<8x128xf32>
    %29 = tpu.matmul %19, %7, %cst_19 {dimension_numbers = #tpu.dot_dimension_numbers<[1], [0], [0], [1], [0, 0, 1, 1], [], []>} : vector<8x8xf32>, vector<8x128xf32>, vector<8x128xf32> -> vector<8x128xf32>
    %30 = arith.addf %28, %29 : vector<8x128xf32>
    %c0_20 = arith.constant 0 : index
    %c0_21 = arith.constant 0 : index
    %31 = vector.load %arg10[%c0_20, %c0_21] : memref<8x128xf32, #tpu.memory_space<vmem>>, vector<8x128xf32>
    tpu.vector_store %arg10[%c0_20, %c0_21], %30 {strides = array<i32>} : memref<8x128xf32, #tpu.memory_space<vmem>>, vector<8x128xf32>,
    %c0_22 = arith.constant 0 : index
    %c0_23 = arith.constant 0 : index
    %32 = vector.load %arg8[%c0_22, %c0_23] : memref<8x1xf32, #tpu.memory_space<vmem>>, vector<8x1xf32>
    tpu.vector_store %arg8[%c0_22, %c0_23], %13 {strides = array<i32>} : memref<8x1xf32, #tpu.memory_space<vmem>>, vector<8x1xf32>,
    %c0_i32_24 = arith.constant 0 : i32
    %33 = arith.cmpi eq, %arg1, %c0_i32_24 : i32
    %34 = arith.extui %33 : i1 to i32
    %c0_i32_25 = arith.constant 0 : i32
    %35 = arith.cmpi ne, %34, %c0_i32_25 : i32
    scf.if %35 {
      %c0_26 = arith.constant 0 : index
      %c0_27 = arith.constant 0 : index
      %36 = vector.load %arg9[%c0_26, %c0_27] : memref<8x1xf32, #tpu.memory_space<vmem>>, vector<8x1xf32>
      %37 = tpu.reciprocal %36 : vector<8x1xf32> -> vector<8x1xf32>
      %c0_28 = arith.constant 0 : index
      %c0_29 = arith.constant 0 : index
      %38 = vector.load %arg10[%c0_28, %c0_29] : memref<8x128xf32, #tpu.memory_space<vmem>>, vector<8x128xf32>
      %39 = vector.broadcast %37 : vector<8x1xf32> to vector<8x128xf32>
      %40 = arith.mulf %38, %39 : vector<8x128xf32>
      %c0_30 = arith.constant 0 : index
      %c0_31 = arith.constant 0 : index
      %41 = vector.load %arg6[%c0_30, %c0_31] : memref<8x128xf32, #tpu.memory_space<vmem>>, vector<8x128xf32>
      tpu.vector_store %arg6[%c0_30, %c0_31], %40 {strides = array<i32>} : memref<8x128xf32, #tpu.memory_space<vmem>>, vector<8x128xf32>,
    } else {
    }
    return
  }
  func.func @transform_0(%arg0: i32, %arg1: i32) -> (i32, i32) {
    %c0_i32 = arith.constant 0 : i32
    %c0_i32_0 = arith.constant 0 : i32
    return %arg0, %c0_i32 : i32, i32
  }
  func.func @transform_1(%arg0: i32, %arg1: i32) -> (i32, i32) {
    %c0_i32 = arith.constant 0 : i32
    %c0_i32_0 = arith.constant 0 : i32
    return %arg1, %c0_i32 : i32, i32
  }
  func.func @transform_2(%arg0: i32, %arg1: i32) -> (i32, i32) {
    %c0_i32 = arith.constant 0 : i32
    %c0_i32_0 = arith.constant 0 : i32
    %c0_i32_1 = arith.constant 0 : i32
    return %c0_i32, %c0_i32_0 : i32, i32
  }
  func.func @transform_3(%arg0: i32, %arg1: i32) -> (i32, i32) {
    %c0_i32 = arith.constant 0 : i32
    %c0_i32_0 = arith.constant 0 : i32
    %c0_i32_1 = arith.constant 0 : i32
    return %c0_i32, %c0_i32_0 : i32, i32
  }
  func.func @transform_4(%arg0: i32, %arg1: i32) -> (i32, i32) {
    %c0_i32 = arith.constant 0 : i32
    %c0_i32_0 = arith.constant 0 : i32
    return %arg0, %c0_i32 : i32, i32
  }
}

</mosaic_0001>

<llo_original>
// kernel: tpu_custom_call.1
$region0: #{tpu_custom_call.1}
  #allocation0 [shape = 'u32[]', space=smem, size = 0x4, offset = 0x4, fixed_abs, tag = 'smem constant byte address 0x4 - core index']
  #allocation1 [shape = 'u32[144,128]{1,0:T(1,128)}', space=vmem, size = 0x12000, scoped, tag = 'internal scratch']
  #allocation2 [shape = 'f32[8,128]{1,0:T(8,128)}', space=vmem, size = 0x1000, scoped, tag = 'scratch operand']
  #allocation3 [shape = 'f32[8,1]{1,0:T(8,128)}', space=vmem, size = 0x1000, scoped, tag = 'scratch operand']
  #allocation4 [shape = 'f32[8,1]{1,0:T(8,128)}', space=vmem, size = 0x1000, scoped, tag = 'scratch operand']
  #allocation5 [shape = 'f32[8,128]{1,0:T(8,128)}', space=vmem, size = 0x1000, scoped, tag = 'scratch operand']
  %s0 = inlined_call_operand.hbm [shape: f32[8,32], index: 0, kind: input, shape index: {}]
  %s1 = inlined_call_operand.hbm [shape: f32[8,32], index: 1, kind: input, shape index: {}]
  %s2 = inlined_call_operand.hbm [shape: f32[32,128], index: 2, kind: input, shape index: {}]
  %s3 = inlined_call_operand.hbm [shape: f32[32,256], index: 3, kind: input, shape index: {}]
  %s4 = inlined_call_operand.hbm [shape: f32[8,128], index: 4, kind: output, shape index: {}]
  %s5 = sld [smem:[#allocation0]]
  $region50: #{tpu_custom_call.1} parent=0
    _
  %s7 = ssub.s32 1, %s5
  %s8 = scalar_select 0, %s7, %s5
  $region1: #{tpu_custom_call.1} parent=0
    #allocation6 [shape = 'u8[4096]{0}', space=vmem, size = 0x1000, scoped, tag = 'input window, operand 0, single buffered']
    #allocation7 [shape = 's32[1]{0}', space=sflag, size = 0x4, scoped, tag = 'scoped memory for tpu_custom_call.1']
    #allocation8 [shape = 's32[1]{0}', space=sflag, size = 0x4, scoped, tag = 'scoped memory for tpu_custom_call.1']
    #allocation9 [shape = 'u8[4096]{0}', space=vmem, size = 0x1000, scoped, tag = 'input window, operand 1, single buffered']
    #allocation10 [shape = 's32[1]{0}', space=sflag, size = 0x4, scoped, tag = 'scoped memory for tpu_custom_call.1']
    #allocation11 [shape = 'u8[16384]{0}', space=vmem, size = 0x4000, scoped, tag = 'input window, operand 2, single buffered']
    #allocation12 [shape = 'u8[32768]{0}', space=vmem, size = 0x8000, scoped, tag = 'input window, operand 3, single buffered']
    #allocation13 [shape = 's32[1]{0}', space=sflag, size = 0x4, scoped, tag = 'scoped memory for tpu_custom_call.1']
    #allocation14 [shape = 'u8[4096]{0}', space=vmem, size = 0x1000, scoped, tag = 'output window, operand 0, single buffered']
    %9 = vsyncpa [#allocation7], 0
    %10 = vsyncpa [#allocation10], 0
    %11 = vsyncpa [#allocation13], 0
    %12 = vsyncpa [#allocation8], 0
    // Predicated region
    $region2: #{tpu_custom_call.1} parent=1 // pred_check
      _
    $region3: #{tpu_custom_call.1} parent=1 // pred_check_branch
      %14 = sbr.rel (0) target = $region5
    $region4: #{tpu_custom_call.1} parent=1 // pred_region
      %s16 = ssub.s32 128, 128
      %17 = vsyncadd [#allocation7], %s16
      %s19 = sshll.u32 [#allocation6], 4
      %s20 = int_to_ptr.vmem [resolvable:$true] %s19
      %22 = dma.hbm_to_vmem [thread:$0]  %s0, 128, %s20, [#allocation7]
    $region5: #{tpu_custom_call.1} parent=1 // pred_fallthru
      _
    // Predicated region
    $region6: #{tpu_custom_call.1} parent=1 // pred_check
      _
    $region7: #{tpu_custom_call.1} parent=1 // pred_check_branch
      %24 = sbr.rel (0) target = $region9
    $region8: #{tpu_custom_call.1} parent=1 // pred_region
      %s26 = ssub.s32 128, 128
      %27 = vsyncadd [#allocation10], %s26
      %s29 = sshll.u32 [#allocation9], 4
      %s30 = int_to_ptr.vmem [resolvable:$true] %s29
      %32 = dma.hbm_to_vmem [thread:$0]  %s1, 128, %s30, [#allocation10]
    $region9: #{tpu_custom_call.1} parent=1 // pred_fallthru
      _
    // Predicated region
    $region10: #{tpu_custom_call.1} parent=1 // pred_check
      _
    $region11: #{tpu_custom_call.1} parent=1 // pred_check_branch
      %34 = sbr.rel (0) target = $region13
    $region12: #{tpu_custom_call.1} parent=1 // pred_region
      %s36 = ssub.s32 512, 512
      %37 = vsyncadd [#allocation10], %s36
      %s38 = sshll.u32 [#allocation11], 4
      %s39 = int_to_ptr.vmem [resolvable:$true] %s38
      %44 = dma.hbm_to_vmem [thread:$0]  %s2, 512, %s39, [#allocation10], 128, 128, 8
    $region13: #{tpu_custom_call.1} parent=1 // pred_fallthru
      _
    // Predicated region
    $region14: #{tpu_custom_call.1} parent=1 // pred_check
      _
    $region15: #{tpu_custom_call.1} parent=1 // pred_check_branch
      %46 = sbr.rel (0) target = $region17
    $region16: #{tpu_custom_call.1} parent=1 // pred_region
      %s48 = ssub.s32 1024, 1024
      %49 = vsyncadd [#allocation13], %s48
      %s50 = sshll.u32 [#allocation12], 4
      %s51 = int_to_ptr.vmem [resolvable:$true] %s50
      %56 = dma.hbm_to_vmem [thread:$0]  %s3, 1024, %s51, [#allocation13], 256, 256, 16
    $region17: #{tpu_custom_call.1} parent=1 // pred_fallthru
      _
    // Predicated region
    $region18: #{tpu_custom_call.1} parent=1 // pred_check
      _
    $region19: #{tpu_custom_call.1} parent=1 // pred_check_branch
      %58 = sbr.rel (0) target = $region21
    $region20: #{tpu_custom_call.1} parent=1 // pred_region
      %59 = dma.done [#allocation7], 128
    $region21: #{tpu_custom_call.1} parent=1 // pred_fallthru
      _
    // Predicated region
    $region22: #{tpu_custom_call.1} parent=1 // pred_check
      _
    $region23: #{tpu_custom_call.1} parent=1 // pred_check_branch
      %61 = sbr.rel (0) target = $region25
    $region24: #{tpu_custom_call.1} parent=1 // pred_region
      %62 = dma.done [#allocation10], 128
    $region25: #{tpu_custom_call.1} parent=1 // pred_fallthru
      _
    // Predicated region
    $region26: #{tpu_custom_call.1} parent=1 // pred_check
      _
    $region27: #{tpu_custom_call.1} parent=1 // pred_check_branch
      %64 = sbr.rel (0) target = $region29
    $region28: #{tpu_custom_call.1} parent=1 // pred_region
      %65 = dma.done [#allocation10], 512
    $region29: #{tpu_custom_call.1} parent=1 // pred_fallthru
      _
    // Predicated region
    $region30: #{tpu_custom_call.1} parent=1 // pred_check
      _
    $region31: #{tpu_custom_call.1} parent=1 // pred_check_branch
      %67 = sbr.rel (0) target = $region33
    $region32: #{tpu_custom_call.1} parent=1 // pred_region
      %68 = dma.done [#allocation13], 1024
    $region33: #{tpu_custom_call.1} parent=1 // pred_fallthru
      _
    %p69 = scmp.eq.s32.totalorder 0, 0
    // Predicated region
    $region34: #{tpu_custom_call.1} parent=1 // pred_check
      %p70 = pneg %p69
    $region35: #{tpu_custom_call.1} parent=1 // pred_check_branch
      %72 = sbr.rel (%p70) target = $region37
    $region36: #{tpu_custom_call.1} parent=1 // pred_region
      %v73 = vld [vmem:[#allocation6] sm:$0xff]
      %v74 = vld [vmem:[#allocation11] sm:$0xff]
      %v75 = vld [vmem:[#allocation11 + $0x8] sm:$0xff]
      %v76 = vld [vmem:[#allocation11 + $0x10] sm:$0xff]
      %v77 = vld [vmem:[#allocation11 + $0x18] sm:$0xff]
      %vm78 = vcmask 261120
      %v80 = vsel %vm78, %v73, 0
      %82 = vmatprep.subr.mxu0 0.0
      %83 = vmatpush1.msra.mxu0 %v74
      %84 = vmatprep.subr.mxu0 0.0
      %85 = vmatpush1.msra.mxu0 %v75
      %86 = vmatprep.subr.mxu0 0.0
      %87 = vmatpush1.msra.mxu0 %v76
      %88 = vmatprep.subr.mxu0 0.0
      %89 = vmatpush1.msra.mxu0 %v77
      %90 = vmatprep.subr.mxu0 0.0
      %91 = vmatpush1.msra.mxu0 0.0
      %92 = vmatprep.subr.mxu0 0.0
      %93 = vmatpush1.msra.mxu0 0.0
      %94 = vmatprep.subr.mxu0 0.0
      %95 = vmatpush1.msra.mxu0 0.0
      %96 = vmatprep.subr.mxu0 0.0
      %97 = vmatpush1.msra.mxu0 0.0
      %98 = vmatprep.subr.mxu0 0.0
      %99 = vmatpush1.msra.mxu0 0.0
      %100 = vmatprep.subr.mxu0 0.0
      %101 = vmatpush1.msra.mxu0 0.0
      %102 = vmatprep.subr.mxu0 0.0
      %103 = vmatpush1.msra.mxu0 0.0
      %104 = vmatprep.subr.mxu0 0.0
      %105 = vmatpush1.msra.mxu0 0.0
      %106 = vmatprep.subr.mxu0 0.0
      %107 = vmatpush1.msra.mxu0 0.0
      %108 = vmatprep.subr.mxu0 0.0
      %109 = vmatpush1.msra.mxu0 0.0
      %110 = vmatprep.subr.mxu0 0.0
      %111 = vmatpush1.msra.mxu0 0.0
      %112 = vmatprep.subr.mxu0 0.0
      %113 = vmatpush1.msra.mxu0 0.0
      %114 = vmatprep.subr.mxu0 0.0
      %115 = vmatpush1.msra.mxu0 0.0
      %116 = vmatprep.subr.mxu0 0.0
      %117 = vmatpush1.msra.mxu0 0.0
      %118 = vmatprep.subr.mxu0 0.0
      %119 = vmatpush1.msra.mxu0 0.0
      %120 = vmatprep.subr.mxu0 0.0
      %121 = vmatpush1.msra.mxu0 0.0
      %122 = vmatprep.subr.mxu0 0.0
      %123 = vmatpush1.msra.mxu0 0.0
      %124 = vmatprep.subr.mxu0 0.0
      %125 = vmatpush1.msra.mxu0 0.0
      %126 = vmatprep.subr.mxu0 0.0
      %127 = vmatpush1.msra.mxu0 0.0
      %128 = vmatprep.subr.mxu0 0.0
      %129 = vmatpush1.msra.mxu0 0.0
      %130 = vmatprep.subr.mxu0 0.0
      %131 = vmatpush1.msra.mxu0 0.0
      %132 = vmatprep.subr.mxu0 0.0
      %133 = vmatpush1.msra.mxu0 0.0
      %134 = vmatprep.subr.mxu0 0.0
      %135 = vmatpush1.msra.mxu0 0.0
      %136 = vmatprep.subr.mxu0 0.0
      %137 = vmatpush1.msra.mxu0 0.0
      %138 = vmatprep.subr.mxu0 0.0
      %139 = vmatpush1.msra.mxu0 0.0
      %140 = vmatprep.subr.mxu0 0.0
      %141 = vmatpush1.msra.mxu0 0.0
      %142 = vmatprep.subr.mxu0 0.0
      %143 = vmatpush1.msra.mxu0 0.0
      %144 = vmatprep.subr.mxu0 0.0
      %145 = vmatpush1.msra.mxu0 0.0
      %146 = vmatprep.mubr.f32.mxu0 0.0
      %147 = vmatmul.mubr.f32.gmra.mrb[0].mxu0 %v80
      %v148 = vpop.f32.mrb[0].mxu0
      %v149 = vadd.f32 0.0, %v148
      %v150 = vpop.f32.mrb[0].mxu0
      %151 = vdwg.mxu0
      %v152 = vmul.f32 %v149, 0.25
      %153 = vst [vmem:[#allocation2] sm:$0xff] %v152
      %vm154 = vcmask 7168
      %155 = vst.msk [vmem:[#allocation3] sm:$0xff] %vm154, -inf
      %156 = vst.msk [vmem:[#allocation4] sm:$0xff] %vm154, 0.0
      %157 = vst [vmem:[#allocation5] sm:$0xff] 0.0
    $region37: #{tpu_custom_call.1} parent=1 // pred_fallthru
      _
    %v158 = vld [vmem:[#allocation9] sm:$0xff]
    %v159 = vld [vmem:[#allocation12] sm:$0xff]
    %v160 = vld [vmem:[#allocation12 + $0x8] sm:$0xff]
    %v161 = vld [vmem:[#allocation12 + $0x10] sm:$0xff]
    %v162 = vld [vmem:[#allocation12 + $0x18] sm:$0xff]
    %v163 = vld [vmem:[#allocation12 + $0x20] sm:$0xff]
    %v164 = vld [vmem:[#allocation12 + $0x28] sm:$0xff]
    %v165 = vld [vmem:[#allocation12 + $0x30] sm:$0xff]
    %v166 = vld [vmem:[#allocation12 + $0x38] sm:$0xff]
    %vm167 = vcmask 261120
    %v169 = vsel %vm167, %v158, 0
    %171 = vmatprep.subr.mxu0 %v160
    %172 = vmatpush1.msra.mxu0 %v159
    %173 = vmatprep.subr.mxu0 %v162
    %174 = vmatpush1.msra.mxu0 %v161
    %175 = vmatprep.subr.mxu0 %v164
    %176 = vmatpush1.msra.mxu0 %v163
    %177 = vmatprep.subr.mxu0 %v166
    %178 = vmatpush1.msra.mxu0 %v165
    %179 = vmatprep.subr.mxu0 0.0
    %180 = vmatpush1.msra.mxu0 0.0
    %181 = vmatprep.subr.mxu0 0.0
    %182 = vmatpush1.msra.mxu0 0.0
    %183 = vmatprep.subr.mxu0 0.0
    %184 = vmatpush1.msra.mxu0 0.0
    %185 = vmatprep.subr.mxu0 0.0
    %186 = vmatpush1.msra.mxu0 0.0
    %187 = vmatprep.subr.mxu0 0.0
    %188 = vmatpush1.msra.mxu0 0.0
    %189 = vmatprep.subr.mxu0 0.0
    %190 = vmatpush1.msra.mxu0 0.0
    %191 = vmatprep.subr.mxu0 0.0
    %192 = vmatpush1.msra.mxu0 0.0
    %193 = vmatprep.subr.mxu0 0.0
    %194 = vmatpush1.msra.mxu0 0.0
    %195 = vmatprep.subr.mxu0 0.0
    %196 = vmatpush1.msra.mxu0 0.0
    %197 = vmatprep.subr.mxu0 0.0
    %198 = vmatpush1.msra.mxu0 0.0
    %199 = vmatprep.subr.mxu0 0.0
    %200 = vmatpush1.msra.mxu0 0.0
    %201 = vmatprep.subr.mxu0 0.0
    %202 = vmatpush1.msra.mxu0 0.0
    %203 = vmatprep.subr.mxu0 0.0
    %204 = vmatpush1.msra.mxu0 0.0
    %205 = vmatprep.subr.mxu0 0.0
    %206 = vmatpush1.msra.mxu0 0.0
    %207 = vmatprep.subr.mxu0 0.0
    %208 = vmatpush1.msra.mxu0 0.0
    %209 = vmatprep.subr.mxu0 0.0
    %210 = vmatpush1.msra.mxu0 0.0
    %211 = vmatprep.subr.mxu0 0.0
    %212 = vmatpush1.msra.mxu0 0.0
    %213 = vmatprep.subr.mxu0 0.0
    %214 = vmatpush1.msra.mxu0 0.0
    %215 = vmatprep.subr.mxu0 0.0
    %216 = vmatpush1.msra.mxu0 0.0
    %217 = vmatprep.subr.mxu0 0.0
    %218 = vmatpush1.msra.mxu0 0.0
    %219 = vmatprep.subr.mxu0 0.0
    %220 = vmatpush1.msra.mxu0 0.0
    %221 = vmatprep.subr.mxu0 0.0
    %222 = vmatpush1.msra.mxu0 0.0
    %223 = vmatprep.subr.mxu0 0.0
    %224 = vmatpush1.msra.mxu0 0.0
    %225 = vmatprep.subr.mxu0 0.0
    %226 = vmatpush1.msra.mxu0 0.0
    %227 = vmatprep.subr.mxu0 0.0
    %228 = vmatpush1.msra.mxu0 0.0
    %229 = vmatprep.subr.mxu0 0.0
    %230 = vmatpush1.msra.mxu0 0.0
    %231 = vmatprep.subr.mxu0 0.0
    %232 = vmatpush1.msra.mxu0 0.0
    %233 = vmatprep.subr.mxu0 0.0
    %234 = vmatpush1.msra.mxu0 0.0
    %235 = vmatprep.mubr.f32.mxu0 0.0
    %236 = vmatmul.mubr.f32.gmra.mrb[0].mxu0 %v169
    %v237 = vpop.f32.mrb[0].mxu0
    %v238 = vadd.f32 0.0, %v237
    %v239 = vpop.f32.mrb[0].mxu0
    %v240 = vadd.f32 0.0, %v239
    %241 = vdwg.mxu0
    %v242 = vld [vmem:[#allocation2] sm:$0xff]
    %243 = vmatprep.subr.mxu0 0.0
    %244 = vmatpush1.xpose.msra.mxu0 %v238
    %245 = vmatprep.subr.mxu0 0.0
    %246 = vmatpush1.xpose.msra.mxu0 0.0
    %247 = vmatprep.subr.mxu0 0.0
    %248 = vmatpush1.xpose.msra.mxu0 0.0
    %249 = vmatprep.subr.mxu0 0.0
    %250 = vmatpush1.xpose.msra.mxu0 0.0
    %251 = vmatprep.subr.mxu0 0.0
    %252 = vmatpush1.xpose.msra.mxu0 0.0
    %253 = vmatprep.subr.mxu0 0.0
    %254 = vmatpush1.xpose.msra.mxu0 0.0
    %255 = vmatprep.subr.mxu0 0.0
    %256 = vmatpush1.xpose.msra.mxu0 0.0
    %257 = vmatprep.subr.mxu0 0.0
    %258 = vmatpush1.xpose.msra.mxu0 0.0
    %259 = vmatprep.subr.mxu0 0.0
    %260 = vmatpush1.xpose.msra.mxu0 0.0
    %261 = vmatprep.subr.mxu0 0.0
    %262 = vmatpush1.xpose.msra.mxu0 0.0
    %263 = vmatprep.subr.mxu0 0.0
    %264 = vmatpush1.xpose.msra.mxu0 0.0
    %265 = vmatprep.subr.mxu0 0.0
    %266 = vmatpush1.xpose.msra.mxu0 0.0
    %267 = vmatprep.subr.mxu0 0.0
    %268 = vmatpush1.xpose.msra.mxu0 0.0
    %269 = vmatprep.subr.mxu0 0.0
    %270 = vmatpush1.xpose.msra.mxu0 0.0
    %271 = vmatprep.subr.mxu0 0.0
    %272 = vmatpush1.xpose.msra.mxu0 0.0
    %273 = vmatprep.subr.mxu0 0.0
    %274 = vmatpush1.xpose.msra.mxu0 0.0
    %275 = vmatprep.subr.mxu0 0.0
    %276 = vmatpush1.xpose.msra.mxu0 0.0
    %277 = vmatprep.subr.mxu0 0.0
    %278 = vmatpush1.xpose.msra.mxu0 0.0
    %279 = vmatprep.subr.mxu0 0.0
    %280 = vmatpush1.xpose.msra.mxu0 0.0
    %281 = vmatprep.subr.mxu0 0.0
    %282 = vmatpush1.xpose.msra.mxu0 0.0
    %283 = vmatprep.subr.mxu0 0.0
    %284 = vmatpush1.xpose.msra.mxu0 0.0
    %285 = vmatprep.subr.mxu0 0.0
    %286 = vmatpush1.xpose.msra.mxu0 0.0
    %287 = vmatprep.subr.mxu0 0.0
    %288 = vmatpush1.xpose.msra.mxu0 0.0
    %289 = vmatprep.subr.mxu0 0.0
    %290 = vmatpush1.xpose.msra.mxu0 0.0
    %291 = vmatprep.subr.mxu0 0.0
    %292 = vmatpush1.xpose.msra.mxu0 0.0
    %293 = vmatprep.subr.mxu0 0.0
    %294 = vmatpush1.xpose.msra.mxu0 0.0
    %295 = vmatprep.subr.mxu0 0.0
    %296 = vmatpush1.xpose.msra.mxu0 0.0
    %297 = vmatprep.subr.mxu0 0.0
    %298 = vmatpush1.xpose.msra.mxu0 0.0
    %299 = vmatprep.subr.mxu0 0.0
    %300 = vmatpush1.xpose.msra.mxu0 0.0
    %301 = vmatprep.subr.mxu0 0.0
    %302 = vmatpush1.xpose.msra.mxu0 0.0
    %303 = vmatprep.subr.mxu0 0.0
    %304 = vmatpush1.xpose.msra.mxu0 0.0
    %305 = vmatprep.subr.mxu0 0.0
    %306 = vmatpush1.xpose.msra.mxu0 0.0
    %307 = vmatprep.mubr.f32.mxu0 0.0
    %308 = vmatmul.mubr.f32.gmra.mrb[0].mxu0 %v242
    %v309 = vpop.f32.mrb[0].mxu0
    %v310 = vadd.f32 0.0, %v309
    %v311 = vpop.f32.mrb[0].mxu0
    %312 = vdwg.mxu0
    %v313 = vld [vmem:[#allocation3] sm:$0xff]
    %vm314 = vcmask 64512
    %v315 = vsel %vm314, %v310, -inf
    %316 = vmax.xlane.f32.xlu0 %v315
    %v317 = vpop.xlane.xlu0 %316
    %v318 = vmax.f32 %v313, %v317
    %v319 = vsub.f32 %v313, %v318
    %v320 = vmul.f32 %v319, 1.442695
    %v321 = vpow.pop %v320
    %323 = vset.pattern.permute.xlu0 0
    %324 = vperm.xlu0 %323, %v318
    %v325 = vpop.permute.xlu0 %324
    %v327 = vsub.f32 %v310, %v325
    %v328 = vmul.f32 %v327, 1.442695
    %v329 = vpow.pop %v328
    %v330 = vld [vmem:[#allocation4] sm:$0xff]
    %v331 = vmul.f32 %v321, %v330
    %v332 = vsel %vm314, %v329, 0.0
    %333 = vadd.xlane.f32.xlu0 %v332
    %v334 = vpop.xlane.xlu0 %333
    %v335 = vadd.f32 %v331, %v334
    %vm336 = vcmask 7168
    %337 = vst.msk [vmem:[#allocation4] sm:$0xff] %vm336, %v335
    %v338 = vld [vmem:[#allocation5] sm:$0xff]
    %340 = vset.pattern.permute.xlu0 0
    %341 = vperm.xlu0 %340, %v321
    %v342 = vpop.permute.xlu0 %341
    %v344 = vmul.f32 %v342, %v338
    %v346 = vsel %vm314, %v329, 0
    %348 = vmatprep.subr.mxu0 0.0
    %349 = vmatpush1.msra.mxu0 %v240
    %350 = vmatprep.subr.mxu0 0.0
    %351 = vmatpush1.msra.mxu0 0.0
    %352 = vmatprep.subr.mxu0 0.0
    %353 = vmatpush1.msra.mxu0 0.0
    %354 = vmatprep.subr.mxu0 0.0
    %355 = vmatpush1.msra.mxu0 0.0
    %356 = vmatprep.subr.mxu0 0.0
    %357 = vmatpush1.msra.mxu0 0.0
    %358 = vmatprep.subr.mxu0 0.0
    %359 = vmatpush1.msra.mxu0 0.0
    %360 = vmatprep.subr.mxu0 0.0
    %361 = vmatpush1.msra.mxu0 0.0
    %362 = vmatprep.subr.mxu0 0.0
    %363 = vmatpush1.msra.mxu0 0.0
    %364 = vmatprep.subr.mxu0 0.0
    %365 = vmatpush1.msra.mxu0 0.0
    %366 = vmatprep.subr.mxu0 0.0
    %367 = vmatpush1.msra.mxu0 0.0
    %368 = vmatprep.subr.mxu0 0.0
    %369 = vmatpush1.msra.mxu0 0.0
    %370 = vmatprep.subr.mxu0 0.0
    %371 = vmatpush1.msra.mxu0 0.0
    %372 = vmatprep.subr.mxu0 0.0
    %373 = vmatpush1.msra.mxu0 0.0
    %374 = vmatprep.subr.mxu0 0.0
    %375 = vmatpush1.msra.mxu0 0.0
    %376 = vmatprep.subr.mxu0 0.0
    %377 = vmatpush1.msra.mxu0 0.0
    %378 = vmatprep.subr.mxu0 0.0
    %379 = vmatpush1.msra.mxu0 0.0
    %380 = vmatprep.subr.mxu0 0.0
    %381 = vmatpush1.msra.mxu0 0.0
    %382 = vmatprep.subr.mxu0 0.0
    %383 = vmatpush1.msra.mxu0 0.0
    %384 = vmatprep.subr.mxu0 0.0
    %385 = vmatpush1.msra.mxu0 0.0
    %386 = vmatprep.subr.mxu0 0.0
    %387 = vmatpush1.msra.mxu0 0.0
    %388 = vmatprep.subr.mxu0 0.0
    %389 = vmatpush1.msra.mxu0 0.0
    %390 = vmatprep.subr.mxu0 0.0
    %391 = vmatpush1.msra.mxu0 0.0
    %392 = vmatprep.subr.mxu0 0.0
    %393 = vmatpush1.msra.mxu0 0.0
    %394 = vmatprep.subr.mxu0 0.0
    %395 = vmatpush1.msra.mxu0 0.0
    %396 = vmatprep.subr.mxu0 0.0
    %397 = vmatpush1.msra.mxu0 0.0
    %398 = vmatprep.subr.mxu0 0.0
    %399 = vmatpush1.msra.mxu0 0.0
    %400 = vmatprep.subr.mxu0 0.0
    %401 = vmatpush1.msra.mxu0 0.0
    %402 = vmatprep.subr.mxu0 0.0
    %403 = vmatpush1.msra.mxu0 0.0
    %404 = vmatprep.subr.mxu0 0.0
    %405 = vmatpush1.msra.mxu0 0.0
    %406 = vmatprep.subr.mxu0 0.0
    %407 = vmatpush1.msra.mxu0 0.0
    %408 = vmatprep.subr.mxu0 0.0
    %409 = vmatpush1.msra.mxu0 0.0
    %410 = vmatprep.subr.mxu0 0.0
    %411 = vmatpush1.msra.mxu0 0.0
    %412 = vmatprep.mubr.f32.mxu0 0.0
    %413 = vmatmul.mubr.f32.gmra.mrb[0].mxu0 %v346
    %v414 = vpop.f32.mrb[0].mxu0
    %v415 = vadd.f32 0.0, %v414
    %v416 = vpop.f32.mrb[0].mxu0
    %417 = vdwg.mxu0
    %v418 = vadd.f32 %v344, %v415
    %419 = vst [vmem:[#allocation5] sm:$0xff] %v418
    %420 = vst.msk [vmem:[#allocation3] sm:$0xff] %vm336, %v318
    // Predicated region
    $region38: #{tpu_custom_call.1} parent=1 // pred_check
      %p421 = pneg %p69
    $region39: #{tpu_custom_call.1} parent=1 // pred_check_branch
      %423 = sbr.rel (%p421) target = $region41
    $region40: #{tpu_custom_call.1} parent=1 // pred_region
      %v424 = vld [vmem:[#allocation4] sm:$0xff]
      %v425 = vrcp.pop %v424
      %v426 = vld [vmem:[#allocation5] sm:$0xff]
      %428 = vset.pattern.permute.xlu0 0
      %429 = vperm.xlu0 %428, %v425
      %v430 = vpop.permute.xlu0 %429
      %v432 = vmul.f32 %v426, %v430
      %433 = vst [vmem:[#allocation14] sm:$0xff] %v432
    $region41: #{tpu_custom_call.1} parent=1 // pred_fallthru
      _
    // Predicated region
    $region42: #{tpu_custom_call.1} parent=1 // pred_check
      _
    $region43: #{tpu_custom_call.1} parent=1 // pred_check_branch
      %435 = sbr.rel (0) target = $region45
    $region44: #{tpu_custom_call.1} parent=1 // pred_region
      %s437 = ssub.s32 128, 128
      %438 = vsyncadd [#allocation8], %s437
      %s440 = sshll.u32 [#allocation14], 4
      %s441 = int_to_ptr.vmem [resolvable:$true] %s440
      %443 = dma.vmem_to_hbm [thread:$0]  %s441, 128, %s4, [#allocation8]
    $region45: #{tpu_custom_call.1} parent=1 // pred_fallthru
      _
    // Predicated region
    $region46: #{tpu_custom_call.1} parent=1 // pred_check
      _
    $region47: #{tpu_custom_call.1} parent=1 // pred_check_branch
      %445 = sbr.rel (0) target = $region49
    $region48: #{tpu_custom_call.1} parent=1 // pred_region
      %446 = dma.done [#allocation8], 128
    $region49: #{tpu_custom_call.1} parent=1 // pred_fallthru
      _
    %447 = vsyncpa [#allocation7], 1
    %448 = vsyncpa [#allocation10], 1
    %449 = vsyncpa [#allocation13], 1
    %450 = vsyncpa [#allocation8], 1

</llo_original>
